<compile_context>
chip_gen: v7x
topology: tpu7x:2x2x1
jax: 0.10.0
libtpu: 0.0.40
codegen_flags: <defaults>
</compile_context>

<pallas_src>
import functools

import jax
import jax.numpy as jnp
from jax.experimental import pallas as pl
from jax.experimental.pallas import tpu as pltpu


def _round_up(v, m):
    return ((v + m - 1) // m) * m


def _cnn_kernel(x_ref, wc_ref, w1_ref, w2_ref, b_ref, o_ref, *, hidden, o_pad):
    # x_ref: (Bt, 3*Cin) im2col rows (flattened batch*out_len)
    # wc_ref: (3*Cin, H) fused conv taps;  w1_ref: (H, H);  w2_ref: (H, O_pad)
    # b_ref: (3, P) packed biases: row0 conv_b[:H], row1 fc1_b[:H], row2 fc2_b[:O_pad]
    xb = x_ref[...]

    # fused 3-tap conv as one matmul (f32 accumulate) + bias + ReLU
    h = jnp.dot(xb, wc_ref[...], preferred_element_type=jnp.float32)
    h = jnp.maximum(h + b_ref[0:1, :hidden], 0.0)
    h = h.astype(w1_ref.dtype)

    # fc1 + ReLU
    h1 = jnp.dot(h, w1_ref[...], preferred_element_type=jnp.float32)
    h1 = jnp.maximum(h1 + b_ref[1:2, :hidden], 0.0)
    h1 = h1.astype(w2_ref.dtype)

    # fc2 (lane-dense padded output)
    out = jnp.dot(h1, w2_ref[...], preferred_element_type=jnp.float32)
    out = out + b_ref[2:3, :o_pad]
    o_ref[...] = out.astype(o_ref.dtype)


def cnn_forward(x, params, output_length=1, *, block_rows=128,
                compute_dtype=jnp.float32):
    """x: (B, L, input_size) -> (B, output_length, output_size)."""
    conv_w, conv_b, fc1_w, fc1_b, fc2_w, fc2_b = params
    B, L, Cin = x.shape
    H = conv_w.shape[0]
    O = fc2_w.shape[0]
    out_len = output_length
    assert 1 <= out_len <= L, "output_length must be in [1, L]"
    out_dtype = x.dtype

    # --- wrapper-side prep (tiny XLA ops; the kernel only sees the needed rows) ---
    # conv output rows [L-out_len, L) need x rows [L-out_len-1, L] plus zero pad.
    xp = jnp.pad(x, ((0, 0), (1, 1), (0, 0)))                 # (B, L+2, Cin)
    xw = xp[:, L - out_len:L + 2, :]                          # (B, out_len+2, Cin)
    # im2col: row j <- [x[t-1], x[t], x[t+1]] for t = L-out_len+j
    xi = jnp.concatenate(
        [xw[:, 0:out_len], xw[:, 1:out_len + 1], xw[:, 2:out_len + 2]], axis=-1)
    rows = B * out_len
    xi = xi.reshape(rows, 3 * Cin).astype(compute_dtype)

    # row tiling: flatten batch into the matmul M dimension, tile with Bt rows/step
    rows8 = _round_up(rows, 8)
    Bt = _round_up(min(block_rows, rows8), 8)
    rows_pad = _round_up(rows, Bt)
    if rows_pad > rows:
        xi = jnp.pad(xi, ((0, rows_pad - rows), (0, 0)))

    # weights: fuse conv taps, transpose fc weights, pad fc2 to lane-dense O_pad
    O_pad = _round_up(O, 128)
    wc = jnp.concatenate(
        [conv_w[:, :, 0].T, conv_w[:, :, 1].T, conv_w[:, :, 2].T],
        axis=0).astype(compute_dtype)                         # (3*Cin, H)
    w1 = fc1_w.T.astype(compute_dtype)                        # (H, H)
    w2 = jnp.zeros((H, O_pad), compute_dtype).at[:, :O].set(
        fc2_w.T.astype(compute_dtype))                        # (H, O_pad)
    P = max(H, O_pad)
    bias = jnp.zeros((3, P), jnp.float32)
    bias = bias.at[0, :H].set(conv_b.astype(jnp.float32))
    bias = bias.at[1, :H].set(fc1_b.astype(jnp.float32))
    bias = bias.at[2, :O].set(fc2_b.astype(jnp.float32))

    kernel = functools.partial(_cnn_kernel, hidden=H, o_pad=O_pad)

    def full(a):
        return pl.BlockSpec(a.shape, lambda i: (0,) * a.ndim)

    out_flat = pl.pallas_call(
        kernel,
        out_shape=jax.ShapeDtypeStruct((rows_pad, O_pad), out_dtype),
        grid_spec=pltpu.PrefetchScalarGridSpec(
            num_scalar_prefetch=0,
            grid=(rows_pad // Bt,),
            in_specs=[
                pl.BlockSpec((Bt, 3 * Cin), lambda i: (i, 0)),
                full(wc), full(w1), full(w2), full(bias),
            ],
            out_specs=pl.BlockSpec((Bt, O_pad), lambda i: (i, 0)),
        ),
        compiler_params=pltpu.CompilerParams(
            dimension_semantics=("parallel",)),
    )(xi, wc, w1, w2, bias)

    return out_flat[:rows, :O].reshape(B, out_len, O).astype(out_dtype)


def _reference(x, params, output_length=1):
    """Pure-JAX reference matching the PyTorch forward semantics."""
    conv_w, conv_b, fc1_w, fc1_b, fc2_w, fc2_b = params
    B, L, Cin = x.shape
    xp = jnp.pad(x, ((0, 0), (1, 1), (0, 0)))
    y = (jnp.einsum("blc,hc->blh", xp[:, 0:L, :], conv_w[:, :, 0]) +
         jnp.einsum("blc,hc->blh", xp[:, 1:L + 1, :], conv_w[:, :, 1]) +
         jnp.einsum("blc,hc->blh", xp[:, 2:L + 2, :], conv_w[:, :, 2]) + conv_b)
    y = jnp.maximum(y, 0.0)
    h = y[:, -output_length:, :]
    h1 = jnp.maximum(h @ fc1_w.T + fc1_b, 0.0)
    return h1 @ fc2_w.T + fc2_b


def init_params(key, input_size, hidden_size, output_size):
    ks = jax.random.split(key, 6)
    conv_w = jax.random.normal(ks[0], (hidden_size, input_size, 3), jnp.float32) * 0.1
    conv_b = jax.random.normal(ks[1], (hidden_size,), jnp.float32) * 0.1
    fc1_w = jax.random.normal(ks[2], (hidden_size, hidden_size), jnp.float32) * 0.1
    fc1_b = jax.random.normal(ks[3], (hidden_size,), jnp.float32) * 0.1
    fc2_w = jax.random.normal(ks[4], (output_size, hidden_size), jnp.float32) * 0.1
    fc2_b = jax.random.normal(ks[5], (output_size,), jnp.float32) * 0.1
    return conv_w, conv_b, fc1_w, fc1_b, fc2_w, fc2_b


if __name__ == "__main__":
    B, L = 2, 8
    input_size, hidden_size, output_size, output_length = 4, 32, 4, 1

    key = jax.random.PRNGKey(0)
    kx, kp = jax.random.split(key)
    x = jax.random.normal(kx, (B, L, input_size), jnp.float32)
    params = init_params(kp, input_size, hidden_size, output_size)

    # NOTE: on v6e/v7x pass compute_dtype=jnp.bfloat16 for MXU peak (f32 accumulate kept).
    out = cnn_forward(x, params, output_length=output_length)
    out = jax.block_until_ready(out)

    ref = _reference(x, params, output_length=output_length)
    assert out.shape == (B, output_length, output_size)
    assert jnp.allclose(out, ref, atol=1e-4, rtol=1e-4)

    print("KERNEL_OK")
</pallas_src>

<mosaic_0001>
module attributes {stable_mosaic.version = 11 : i64} {
  func.func @_cnn_kernel(%arg0: i32, %arg1: memref<8x12xf32, #tpu.memory_space<vmem>>, %arg2: memref<12x32xf32, #tpu.memory_space<vmem>>, %arg3: memref<32x32xf32, #tpu.memory_space<vmem>>, %arg4: memref<32x128xf32, #tpu.memory_space<vmem>>, %arg5: memref<3x128xf32, #tpu.memory_space<vmem>>, %arg6: memref<8x128xf32, #tpu.memory_space<vmem>>) attributes {dimension_semantics = [#tpu.dimension_semantics<parallel>], iteration_bounds = array<i64: 1>, scalar_prefetch = 0 : i64, scratch_operands = 0 : i64, tpu.core_type = #tpu.core_type<tc>, window_params = [{transform_indices = @transform_0, window_bounds = array<i64: 8, 12>}, {pipeline_mode = #tpu.pipeline_mode<synchronous>, transform_indices = @transform_1, window_bounds = array<i64: 12, 32>}, {pipeline_mode = #tpu.pipeline_mode<synchronous>, transform_indices = @transform_2, window_bounds = array<i64: 32, 32>}, {pipeline_mode = #tpu.pipeline_mode<synchronous>, transform_indices = @transform_3, window_bounds = array<i64: 32, 128>}, {pipeline_mode = #tpu.pipeline_mode<synchronous>, transform_indices = @transform_4, window_bounds = array<i64: 3, 128>}, {transform_indices = @transform_5, window_bounds = array<i64: 8, 128>}]} {
    %c0 = arith.constant 0 : index
    %c0_0 = arith.constant 0 : index
    %0 = vector.load %arg1[%c0, %c0_0] : memref<8x12xf32, #tpu.memory_space<vmem>>, vector<8x12xf32>
    %c0_1 = arith.constant 0 : index
    %c0_2 = arith.constant 0 : index
    %1 = vector.load %arg2[%c0_1, %c0_2] : memref<12x32xf32, #tpu.memory_space<vmem>>, vector<12x32xf32>
    %cst = arith.constant dense<0.000000e+00> : vector<8x32xf32>
    %2 = tpu.matmul %0, %1, %cst {dimension_numbers = #tpu.dot_dimension_numbers<[1], [0], [0], [1], [0, 0, 1, 1], [], []>} : vector<8x12xf32>, vector<12x32xf32>, vector<8x32xf32> -> vector<8x32xf32>
    %c0_3 = arith.constant 0 : index
    %c0_4 = arith.constant 0 : index
    %3 = vector.load %arg5[%c0_3, %c0_4] : memref<3x128xf32, #tpu.memory_space<vmem>>, vector<1x32xf32>
    %4 = vector.broadcast %3 : vector<1x32xf32> to vector<8x32xf32>
    %5 = arith.addf %2, %4 : vector<8x32xf32>
    %cst_5 = arith.constant 0.000000e+00 : f32
    %6 = vector.broadcast %cst_5 : f32 to vector<8x32xf32>
    %7 = arith.maximumf %5, %6 : vector<8x32xf32>
    %c0_6 = arith.constant 0 : index
    %c0_7 = arith.constant 0 : index
    %8 = vector.load %arg3[%c0_6, %c0_7] : memref<32x32xf32, #tpu.memory_space<vmem>>, vector<32x32xf32>
    %cst_8 = arith.constant dense<0.000000e+00> : vector<8x32xf32>
    %9 = tpu.matmul %7, %8, %cst_8 {dimension_numbers = #tpu.dot_dimension_numbers<[1], [0], [0], [1], [0, 0, 1, 1], [], []>} : vector<8x32xf32>, vector<32x32xf32>, vector<8x32xf32> -> vector<8x32xf32>
    %c1 = arith.constant 1 : index
    %c0_9 = arith.constant 0 : index
    %10 = vector.load %arg5[%c1, %c0_9] : memref<3x128xf32, #tpu.memory_space<vmem>>, vector<1x32xf32>
    %11 = vector.broadcast %10 : vector<1x32xf32> to vector<8x32xf32>
    %12 = arith.addf %9, %11 : vector<8x32xf32>
    %cst_10 = arith.constant 0.000000e+00 : f32
    %13 = vector.broadcast %cst_10 : f32 to vector<8x32xf32>
    %14 = arith.maximumf %12, %13 : vector<8x32xf32>
    %c0_11 = arith.constant 0 : index
    %c0_12 = arith.constant 0 : index
    %15 = vector.load %arg4[%c0_11, %c0_12] : memref<32x128xf32, #tpu.memory_space<vmem>>, vector<32x128xf32>
    %cst_13 = arith.constant dense<0.000000e+00> : vector<8x128xf32>
    %16 = tpu.matmul %14, %15, %cst_13 {dimension_numbers = #tpu.dot_dimension_numbers<[1], [0], [0], [1], [0, 0, 1, 1], [], []>} : vector<8x32xf32>, vector<32x128xf32>, vector<8x128xf32> -> vector<8x128xf32>
    %c2 = arith.constant 2 : index
    %c0_14 = arith.constant 0 : index
    %17 = vector.load %arg5[%c2, %c0_14] : memref<3x128xf32, #tpu.memory_space<vmem>>, vector<1x128xf32>
    %18 = vector.broadcast %17 : vector<1x128xf32> to vector<8x128xf32>
    %19 = arith.addf %16, %18 : vector<8x128xf32>
    %c0_15 = arith.constant 0 : index
    %c0_16 = arith.constant 0 : index
    %20 = vector.load %arg6[%c0_15, %c0_16] : memref<8x128xf32, #tpu.memory_space<vmem>>, vector<8x128xf32>
    tpu.vector_store %arg6[%c0_15, %c0_16], %19 {strides = array<i32>} : memref<8x128xf32, #tpu.memory_space<vmem>>, vector<8x128xf32>,
    return
  }
  func.func @transform_0(%arg0: i32) -> (i32, i32) {
    %c0_i32 = arith.constant 0 : i32
    %c0_i32_0 = arith.constant 0 : i32
    return %arg0, %c0_i32 : i32, i32
  }
  func.func @transform_1(%arg0: i32) -> (i32, i32) {
    %c0_i32 = arith.constant 0 : i32
    %c0_i32_0 = arith.constant 0 : i32
    %c0_i32_1 = arith.constant 0 : i32
    return %c0_i32, %c0_i32_0 : i32, i32
  }
  func.func @transform_2(%arg0: i32) -> (i32, i32) {
    %c0_i32 = arith.constant 0 : i32
    %c0_i32_0 = arith.constant 0 : i32
    %c0_i32_1 = arith.constant 0 : i32
    return %c0_i32, %c0_i32_0 : i32, i32
  }
  func.func @transform_3(%arg0: i32) -> (i32, i32) {
    %c0_i32 = arith.constant 0 : i32
    %c0_i32_0 = arith.constant 0 : i32
    %c0_i32_1 = arith.constant 0 : i32
    return %c0_i32, %c0_i32_0 : i32, i32
  }
  func.func @transform_4(%arg0: i32) -> (i32, i32) {
    %c0_i32 = arith.constant 0 : i32
    %c0_i32_0 = arith.constant 0 : i32
    %c0_i32_1 = arith.constant 0 : i32
    return %c0_i32, %c0_i32_0 : i32, i32
  }
  func.func @transform_5(%arg0: i32) -> (i32, i32) {
    %c0_i32 = arith.constant 0 : i32
    %c0_i32_0 = arith.constant 0 : i32
    return %arg0, %c0_i32 : i32, i32
  }
}

</mosaic_0001>

<llo_original>
// kernel: tpu_custom_call.1
$region0: #{tpu_custom_call.1}
  #allocation0 [shape = 'u32[]', space=smem, size = 0x4, offset = 0x4, fixed_abs, tag = 'smem constant byte address 0x4 - core index']
  #allocation1 [shape = 'u32[144,128]{1,0:T(1,128)}', space=vmem, size = 0x12000, scoped, tag = 'internal scratch']
  %s0 = inlined_call_operand.hbm [shape: f32[8,12], index: 0, kind: input, shape index: {}]
  %s1 = inlined_call_operand.hbm [shape: f32[12,32], index: 1, kind: input, shape index: {}]
  %s2 = inlined_call_operand.hbm [shape: f32[32,32], index: 2, kind: input, shape index: {}]
  %s3 = inlined_call_operand.hbm [shape: f32[32,128], index: 3, kind: input, shape index: {}]
  %s4 = inlined_call_operand.vmem [shape: f32[3,128], index: 4, kind: input, shape index: {}]
  %s5 = inlined_call_operand.hbm [shape: f32[8,128], index: 5, kind: output, shape index: {}]
  %s6 = sld [smem:[#allocation0]]
  $region46: #{tpu_custom_call.1} parent=0
    _
  %s8 = ssub.s32 1, %s6
  %s9 = scalar_select 0, %s8, %s6
  $region1: #{tpu_custom_call.1} parent=0
    #allocation2 [shape = 'u8[4096]{0}', space=vmem, size = 0x1000, scoped, tag = 'input window, operand 0, single buffered']
    #allocation3 [shape = 's32[1]{0}', space=sflag, size = 0x4, scoped, tag = 'scoped memory for tpu_custom_call.1']
    #allocation4 [shape = 's32[1]{0}', space=sflag, size = 0x4, scoped, tag = 'scoped memory for tpu_custom_call.1']
    #allocation5 [shape = 'u8[8192]{0}', space=vmem, size = 0x2000, scoped, tag = 'input window, operand 1, single buffered']
    #allocation6 [shape = 's32[1]{0}', space=sflag, size = 0x4, scoped, tag = 'scoped memory for tpu_custom_call.1']
    #allocation7 [shape = 'u8[16384]{0}', space=vmem, size = 0x4000, scoped, tag = 'input window, operand 2, single buffered']
    #allocation8 [shape = 'u8[16384]{0}', space=vmem, size = 0x4000, scoped, tag = 'input window, operand 3, single buffered']
    #allocation9 [shape = 's32[1]{0}', space=sflag, size = 0x4, scoped, tag = 'scoped memory for tpu_custom_call.1']
    #allocation10 [shape = 'u8[4096]{0}', space=vmem, size = 0x1000, scoped, tag = 'output window, operand 0, single buffered']
    %10 = vsyncpa [#allocation3], 0
    %11 = vsyncpa [#allocation6], 0
    %12 = vsyncpa [#allocation9], 0
    %13 = vsyncpa [#allocation4], 0
    // Predicated region
    $region2: #{tpu_custom_call.1} parent=1 // pred_check
      _
    $region3: #{tpu_custom_call.1} parent=1 // pred_check_branch
      %15 = sbr.rel (0) target = $region5
    $region4: #{tpu_custom_call.1} parent=1 // pred_region
      %s17 = ssub.s32 128, 128
      %18 = vsyncadd [#allocation3], %s17
      %s20 = sshll.u32 [#allocation2], 4
      %s21 = int_to_ptr.vmem [resolvable:$true] %s20
      %23 = dma.hbm_to_vmem [thread:$0]  %s0, 128, %s21, [#allocation3]
    $region5: #{tpu_custom_call.1} parent=1 // pred_fallthru
      _
    // Predicated region
    $region6: #{tpu_custom_call.1} parent=1 // pred_check
      _
    $region7: #{tpu_custom_call.1} parent=1 // pred_check_branch
      %25 = sbr.rel (0) target = $region9
    $region8: #{tpu_custom_call.1} parent=1 // pred_region
      %s27 = ssub.s32 256, 256
      %28 = vsyncadd [#allocation6], %s27
      %s29 = sshll.u32 [#allocation5], 4
      %s30 = int_to_ptr.vmem [resolvable:$true] %s29
      %35 = dma.hbm_to_vmem [thread:$0]  %s1, 256, %s30, [#allocation6], 128, 128, 8
    $region9: #{tpu_custom_call.1} parent=1 // pred_fallthru
      _
    // Predicated region
    $region10: #{tpu_custom_call.1} parent=1 // pred_check
      _
    $region11: #{tpu_custom_call.1} parent=1 // pred_check_branch
      %37 = sbr.rel (0) target = $region13
    $region12: #{tpu_custom_call.1} parent=1 // pred_region
      %s39 = ssub.s32 512, 512
      %40 = vsyncadd [#allocation6], %s39
      %s41 = sshll.u32 [#allocation7], 4
      %s42 = int_to_ptr.vmem [resolvable:$true] %s41
      %47 = dma.hbm_to_vmem [thread:$0]  %s2, 512, %s42, [#allocation6], 128, 128, 8
    $region13: #{tpu_custom_call.1} parent=1 // pred_fallthru
      _
    // Predicated region
    $region14: #{tpu_custom_call.1} parent=1 // pred_check
      _
    $region15: #{tpu_custom_call.1} parent=1 // pred_check_branch
      %49 = sbr.rel (0) target = $region17
    $region16: #{tpu_custom_call.1} parent=1 // pred_region
      %s51 = ssub.s32 512, 512
      %52 = vsyncadd [#allocation9], %s51
      %s53 = sshll.u32 [#allocation8], 4
      %s54 = int_to_ptr.vmem [resolvable:$true] %s53
      %59 = dma.hbm_to_vmem [thread:$0]  %s3, 512, %s54, [#allocation9], 128, 128, 8
    $region17: #{tpu_custom_call.1} parent=1 // pred_fallthru
      _
    // Predicated region
    $region18: #{tpu_custom_call.1} parent=1 // pred_check
      _
    $region19: #{tpu_custom_call.1} parent=1 // pred_check_branch
      %61 = sbr.rel (0) target = $region21
    $region20: #{tpu_custom_call.1} parent=1 // pred_region
      _
    $region21: #{tpu_custom_call.1} parent=1 // pred_fallthru
      _
    // Predicated region
    $region22: #{tpu_custom_call.1} parent=1 // pred_check
      _
    $region23: #{tpu_custom_call.1} parent=1 // pred_check_branch
      %63 = sbr.rel (0) target = $region25
    $region24: #{tpu_custom_call.1} parent=1 // pred_region
      %64 = dma.done [#allocation3], 128
    $region25: #{tpu_custom_call.1} parent=1 // pred_fallthru
      _
    // Predicated region
    $region26: #{tpu_custom_call.1} parent=1 // pred_check
      _
    $region27: #{tpu_custom_call.1} parent=1 // pred_check_branch
      %66 = sbr.rel (0) target = $region29
    $region28: #{tpu_custom_call.1} parent=1 // pred_region
      %67 = dma.done [#allocation6], 256
    $region29: #{tpu_custom_call.1} parent=1 // pred_fallthru
      _
    // Predicated region
    $region30: #{tpu_custom_call.1} parent=1 // pred_check
      _
    $region31: #{tpu_custom_call.1} parent=1 // pred_check_branch
      %69 = sbr.rel (0) target = $region33
    $region32: #{tpu_custom_call.1} parent=1 // pred_region
      %70 = dma.done [#allocation6], 512
    $region33: #{tpu_custom_call.1} parent=1 // pred_fallthru
      _
    // Predicated region
    $region34: #{tpu_custom_call.1} parent=1 // pred_check
      _
    $region35: #{tpu_custom_call.1} parent=1 // pred_check_branch
      %72 = sbr.rel (0) target = $region37
    $region36: #{tpu_custom_call.1} parent=1 // pred_region
      %73 = dma.done [#allocation9], 512
    $region37: #{tpu_custom_call.1} parent=1 // pred_fallthru
      _
    %v74 = vld [vmem:[#allocation2] sm:$0xff]
    %v75 = vld [vmem:[#allocation5] sm:$0xff]
    %v76 = vld [vmem:[#allocation5 + $0x8] sm:$0xf]
    %v77 = vld [vmem:[%s4] sm:$0x1]
    %v78 = vlaneseq
    %v79 = vshrl.u32 %v78, 7
    %v80 = vsub.s32 0, %v79
    %v81 = vrot.slane %v77, %v80
    %vm82 = vcmask 97280
    %v84 = vsel %vm82, %v74, 0
    %vm86 = vcmask 1043456
    %v88 = vsel %vm86, %v76, 0
    %90 = vmatprep.subr.mxu0 0.0
    %91 = vmatpush1.msra.mxu0 %v75
    %92 = vmatprep.subr.mxu0 0.0
    %93 = vmatpush1.msra.mxu0 %v88
    %94 = vmatprep.subr.mxu0 0.0
    %95 = vmatpush1.msra.mxu0 0.0
    %96 = vmatprep.subr.mxu0 0.0
    %97 = vmatpush1.msra.mxu0 0.0
    %98 = vmatprep.subr.mxu0 0.0
    %99 = vmatpush1.msra.mxu0 0.0
    %100 = vmatprep.subr.mxu0 0.0
    %101 = vmatpush1.msra.mxu0 0.0
    %102 = vmatprep.subr.mxu0 0.0
    %103 = vmatpush1.msra.mxu0 0.0
    %104 = vmatprep.subr.mxu0 0.0
    %105 = vmatpush1.msra.mxu0 0.0
    %106 = vmatprep.subr.mxu0 0.0
    %107 = vmatpush1.msra.mxu0 0.0
    %108 = vmatprep.subr.mxu0 0.0
    %109 = vmatpush1.msra.mxu0 0.0
    %110 = vmatprep.subr.mxu0 0.0
    %111 = vmatpush1.msra.mxu0 0.0
    %112 = vmatprep.subr.mxu0 0.0
    %113 = vmatpush1.msra.mxu0 0.0
    %114 = vmatprep.subr.mxu0 0.0
    %115 = vmatpush1.msra.mxu0 0.0
    %116 = vmatprep.subr.mxu0 0.0
    %117 = vmatpush1.msra.mxu0 0.0
    %118 = vmatprep.subr.mxu0 0.0
    %119 = vmatpush1.msra.mxu0 0.0
    %120 = vmatprep.subr.mxu0 0.0
    %121 = vmatpush1.msra.mxu0 0.0
    %122 = vmatprep.subr.mxu0 0.0
    %123 = vmatpush1.msra.mxu0 0.0
    %124 = vmatprep.subr.mxu0 0.0
    %125 = vmatpush1.msra.mxu0 0.0
    %126 = vmatprep.subr.mxu0 0.0
    %127 = vmatpush1.msra.mxu0 0.0
    %128 = vmatprep.subr.mxu0 0.0
    %129 = vmatpush1.msra.mxu0 0.0
    %130 = vmatprep.subr.mxu0 0.0
    %131 = vmatpush1.msra.mxu0 0.0
    %132 = vmatprep.subr.mxu0 0.0
    %133 = vmatpush1.msra.mxu0 0.0
    %134 = vmatprep.subr.mxu0 0.0
    %135 = vmatpush1.msra.mxu0 0.0
    %136 = vmatprep.subr.mxu0 0.0
    %137 = vmatpush1.msra.mxu0 0.0
    %138 = vmatprep.subr.mxu0 0.0
    %139 = vmatpush1.msra.mxu0 0.0
    %140 = vmatprep.subr.mxu0 0.0
    %141 = vmatpush1.msra.mxu0 0.0
    %142 = vmatprep.subr.mxu0 0.0
    %143 = vmatpush1.msra.mxu0 0.0
    %144 = vmatprep.subr.mxu0 0.0
    %145 = vmatpush1.msra.mxu0 0.0
    %146 = vmatprep.subr.mxu0 0.0
    %147 = vmatpush1.msra.mxu0 0.0
    %148 = vmatprep.subr.mxu0 0.0
    %149 = vmatpush1.msra.mxu0 0.0
    %150 = vmatprep.subr.mxu0 0.0
    %151 = vmatpush1.msra.mxu0 0.0
    %152 = vmatprep.subr.mxu0 0.0
    %153 = vmatpush1.msra.mxu0 0.0
    %154 = vmatprep.mubr.f32.mxu0 0.0
    %155 = vmatmul.mubr.f32.gmra.mrb[0].mxu0 %v84
    %v156 = vpop.f32.mrb[0].mxu0
    %v157 = vadd.f32 %v81, %v156
    %v158 = vpop.f32.mrb[0].mxu0
    %159 = vdwg.mxu0
    %v160 = vmax.f32 %v157, 0.0
    %v161 = vld [vmem:[#allocation7] sm:$0xff]
    %v162 = vld [vmem:[#allocation7 + $0x8] sm:$0xff]
    %v163 = vld [vmem:[#allocation7 + $0x10] sm:$0xff]
    %v164 = vld [vmem:[#allocation7 + $0x18] sm:$0xff]
    %v165 = vld [vmem:[%s4 + $0x1] sm:$0x1]
    %v166 = vlaneseq
    %v167 = vshrl.u32 %v166, 7
    %v168 = vsub.s32 0, %v167
    %v169 = vrot.slane %v165, %v168
    %vm170 = vcmask 261120
    %v172 = vsel %vm170, %v160, 0
    %174 = vmatprep.subr.mxu0 0.0
    %175 = vmatpush1.msra.mxu0 %v161
    %176 = vmatprep.subr.mxu0 0.0
    %177 = vmatpush1.msra.mxu0 %v162
    %178 = vmatprep.subr.mxu0 0.0
    %179 = vmatpush1.msra.mxu0 %v163
    %180 = vmatprep.subr.mxu0 0.0
    %181 = vmatpush1.msra.mxu0 %v164
    %182 = vmatprep.subr.mxu0 0.0
    %183 = vmatpush1.msra.mxu0 0.0
    %184 = vmatprep.subr.mxu0 0.0
    %185 = vmatpush1.msra.mxu0 0.0
    %186 = vmatprep.subr.mxu0 0.0
    %187 = vmatpush1.msra.mxu0 0.0
    %188 = vmatprep.subr.mxu0 0.0
    %189 = vmatpush1.msra.mxu0 0.0
    %190 = vmatprep.subr.mxu0 0.0
    %191 = vmatpush1.msra.mxu0 0.0
    %192 = vmatprep.subr.mxu0 0.0
    %193 = vmatpush1.msra.mxu0 0.0
    %194 = vmatprep.subr.mxu0 0.0
    %195 = vmatpush1.msra.mxu0 0.0
    %196 = vmatprep.subr.mxu0 0.0
    %197 = vmatpush1.msra.mxu0 0.0
    %198 = vmatprep.subr.mxu0 0.0
    %199 = vmatpush1.msra.mxu0 0.0
    %200 = vmatprep.subr.mxu0 0.0
    %201 = vmatpush1.msra.mxu0 0.0
    %202 = vmatprep.subr.mxu0 0.0
    %203 = vmatpush1.msra.mxu0 0.0
    %204 = vmatprep.subr.mxu0 0.0
    %205 = vmatpush1.msra.mxu0 0.0
    %206 = vmatprep.subr.mxu0 0.0
    %207 = vmatpush1.msra.mxu0 0.0
    %208 = vmatprep.subr.mxu0 0.0
    %209 = vmatpush1.msra.mxu0 0.0
    %210 = vmatprep.subr.mxu0 0.0
    %211 = vmatpush1.msra.mxu0 0.0
    %212 = vmatprep.subr.mxu0 0.0
    %213 = vmatpush1.msra.mxu0 0.0
    %214 = vmatprep.subr.mxu0 0.0
    %215 = vmatpush1.msra.mxu0 0.0
    %216 = vmatprep.subr.mxu0 0.0
    %217 = vmatpush1.msra.mxu0 0.0
    %218 = vmatprep.subr.mxu0 0.0
    %219 = vmatpush1.msra.mxu0 0.0
    %220 = vmatprep.subr.mxu0 0.0
    %221 = vmatpush1.msra.mxu0 0.0
    %222 = vmatprep.subr.mxu0 0.0
    %223 = vmatpush1.msra.mxu0 0.0
    %224 = vmatprep.subr.mxu0 0.0
    %225 = vmatpush1.msra.mxu0 0.0
    %226 = vmatprep.subr.mxu0 0.0
    %227 = vmatpush1.msra.mxu0 0.0
    %228 = vmatprep.subr.mxu0 0.0
    %229 = vmatpush1.msra.mxu0 0.0
    %230 = vmatprep.subr.mxu0 0.0
    %231 = vmatpush1.msra.mxu0 0.0
    %232 = vmatprep.subr.mxu0 0.0
    %233 = vmatpush1.msra.mxu0 0.0
    %234 = vmatprep.subr.mxu0 0.0
    %235 = vmatpush1.msra.mxu0 0.0
    %236 = vmatprep.subr.mxu0 0.0
    %237 = vmatpush1.msra.mxu0 0.0
    %238 = vmatprep.mubr.f32.mxu0 0.0
    %239 = vmatmul.mubr.f32.gmra.mrb[0].mxu0 %v172
    %v240 = vpop.f32.mrb[0].mxu0
    %v241 = vadd.f32 %v169, %v240
    %v242 = vpop.f32.mrb[0].mxu0
    %243 = vdwg.mxu0
    %v244 = vmax.f32 %v241, 0.0
    %v245 = vld [vmem:[#allocation8] sm:$0xff]
    %v246 = vld [vmem:[#allocation8 + $0x8] sm:$0xff]
    %v247 = vld [vmem:[#allocation8 + $0x10] sm:$0xff]
    %v248 = vld [vmem:[#allocation8 + $0x18] sm:$0xff]
    %v249 = vld [vmem:[%s4 + $0x2] sm:$0x1]
    %v250 = vlaneseq
    %v251 = vshrl.u32 %v250, 7
    %v252 = vsub.s32 0, %v251
    %v253 = vrot.slane %v249, %v252
    %v255 = vsel %vm170, %v244, 0
    %257 = vmatprep.subr.mxu0 0.0
    %258 = vmatpush1.msra.mxu0 %v245
    %259 = vmatprep.subr.mxu0 0.0
    %260 = vmatpush1.msra.mxu0 %v246
    %261 = vmatprep.subr.mxu0 0.0
    %262 = vmatpush1.msra.mxu0 %v247
    %263 = vmatprep.subr.mxu0 0.0
    %264 = vmatpush1.msra.mxu0 %v248
    %265 = vmatprep.subr.mxu0 0.0
    %266 = vmatpush1.msra.mxu0 0.0
    %267 = vmatprep.subr.mxu0 0.0
    %268 = vmatpush1.msra.mxu0 0.0
    %269 = vmatprep.subr.mxu0 0.0
    %270 = vmatpush1.msra.mxu0 0.0
    %271 = vmatprep.subr.mxu0 0.0
    %272 = vmatpush1.msra.mxu0 0.0
    %273 = vmatprep.subr.mxu0 0.0
    %274 = vmatpush1.msra.mxu0 0.0
    %275 = vmatprep.subr.mxu0 0.0
    %276 = vmatpush1.msra.mxu0 0.0
    %277 = vmatprep.subr.mxu0 0.0
    %278 = vmatpush1.msra.mxu0 0.0
    %279 = vmatprep.subr.mxu0 0.0
    %280 = vmatpush1.msra.mxu0 0.0
    %281 = vmatprep.subr.mxu0 0.0
    %282 = vmatpush1.msra.mxu0 0.0
    %283 = vmatprep.subr.mxu0 0.0
    %284 = vmatpush1.msra.mxu0 0.0
    %285 = vmatprep.subr.mxu0 0.0
    %286 = vmatpush1.msra.mxu0 0.0
    %287 = vmatprep.subr.mxu0 0.0
    %288 = vmatpush1.msra.mxu0 0.0
    %289 = vmatprep.subr.mxu0 0.0
    %290 = vmatpush1.msra.mxu0 0.0
    %291 = vmatprep.subr.mxu0 0.0
    %292 = vmatpush1.msra.mxu0 0.0
    %293 = vmatprep.subr.mxu0 0.0
    %294 = vmatpush1.msra.mxu0 0.0
    %295 = vmatprep.subr.mxu0 0.0
    %296 = vmatpush1.msra.mxu0 0.0
    %297 = vmatprep.subr.mxu0 0.0
    %298 = vmatpush1.msra.mxu0 0.0
    %299 = vmatprep.subr.mxu0 0.0
    %300 = vmatpush1.msra.mxu0 0.0
    %301 = vmatprep.subr.mxu0 0.0
    %302 = vmatpush1.msra.mxu0 0.0
    %303 = vmatprep.subr.mxu0 0.0
    %304 = vmatpush1.msra.mxu0 0.0
    %305 = vmatprep.subr.mxu0 0.0
    %306 = vmatpush1.msra.mxu0 0.0
    %307 = vmatprep.subr.mxu0 0.0
    %308 = vmatpush1.msra.mxu0 0.0
    %309 = vmatprep.subr.mxu0 0.0
    %310 = vmatpush1.msra.mxu0 0.0
    %311 = vmatprep.subr.mxu0 0.0
    %312 = vmatpush1.msra.mxu0 0.0
    %313 = vmatprep.subr.mxu0 0.0
    %314 = vmatpush1.msra.mxu0 0.0
    %315 = vmatprep.subr.mxu0 0.0
    %316 = vmatpush1.msra.mxu0 0.0
    %317 = vmatprep.subr.mxu0 0.0
    %318 = vmatpush1.msra.mxu0 0.0
    %319 = vmatprep.subr.mxu0 0.0
    %320 = vmatpush1.msra.mxu0 0.0
    %321 = vmatprep.mubr.f32.mxu0 0.0
    %322 = vmatmul.mubr.f32.gmra.mrb[0].mxu0 %v255
    %v323 = vpop.f32.mrb[0].mxu0
    %v324 = vadd.f32 %v253, %v323
    %v325 = vpop.f32.mrb[0].mxu0
    %326 = vdwg.mxu0
    %327 = vst [vmem:[#allocation10] sm:$0xff] %v324
    // Predicated region
    $region38: #{tpu_custom_call.1} parent=1 // pred_check
      _
    $region39: #{tpu_custom_call.1} parent=1 // pred_check_branch
      %329 = sbr.rel (0) target = $region41
    $region40: #{tpu_custom_call.1} parent=1 // pred_region
      %s331 = ssub.s32 128, 128
      %332 = vsyncadd [#allocation4], %s331
      %s334 = sshll.u32 [#allocation10], 4
      %s335 = int_to_ptr.vmem [resolvable:$true] %s334
      %337 = dma.vmem_to_hbm [thread:$0]  %s335, 128, %s5, [#allocation4]
    $region41: #{tpu_custom_call.1} parent=1 // pred_fallthru
      _
    // Predicated region
    $region42: #{tpu_custom_call.1} parent=1 // pred_check
      _
    $region43: #{tpu_custom_call.1} parent=1 // pred_check_branch
      %339 = sbr.rel (0) target = $region45
    $region44: #{tpu_custom_call.1} parent=1 // pred_region
      %340 = dma.done [#allocation4], 128
    $region45: #{tpu_custom_call.1} parent=1 // pred_fallthru
      _
    %341 = vsyncpa [#allocation3], 1
    %342 = vsyncpa [#allocation6], 1
    %343 = vsyncpa [#allocation9], 1
    %344 = vsyncpa [#allocation4], 1

</llo_original>
